<compile_context>
chip_gen: v6e
topology: v6e:2x2x1
jax: 0.10.0
libtpu: 0.0.40
codegen_flags: <defaults>
</compile_context>

<pallas_src>
import jax
import jax.numpy as jnp
from jax import lax
from jax.experimental import pallas as pl
from jax.experimental.pallas import tpu as pltpu

HIDDEN = 256


def _round_up(x, m):
    return ((x + m - 1) // m) * m


def actor_fwd_kernel(state_ref, w1_ref, w2_ref, wh_ref, b12_ref, bh_ref, out_ref):
    # Layer 1: Linear(state_dim -> 256) + ReLU. bf16 MXU inputs, f32 accumulate.
    h1 = jnp.dot(state_ref[...], w1_ref[...], preferred_element_type=jnp.float32)
    h1 = jnp.maximum(h1 + b12_ref[0:1, :], 0.0)

    # Layer 2: Linear(256 -> 256) + ReLU.
    h2 = jnp.dot(h1.astype(jnp.bfloat16), w2_ref[...],
                 preferred_element_type=jnp.float32)
    h2 = jnp.maximum(h2 + b12_ref[1:2, :], 0.0)

    # Fused heads: one matmul produces [mean | log_std] in a single lane tile.
    heads = jnp.dot(h2.astype(jnp.bfloat16), wh_ref[...],
                    preferred_element_type=jnp.float32)
    heads = heads + bh_ref[...]

    # std = exp(clip(log_std, -20, 2)) on the second half; mean passes through.
    # Use a lane mask + where instead of slice/concat to stay in-vreg.
    two_a = heads.shape[-1]
    col = lax.broadcasted_iota(jnp.int32, heads.shape, dimension=1)
    std_all = jnp.exp(jnp.clip(heads, -20.0, 2.0))
    out = jnp.where(col >= (two_a // 2), std_all, heads)
    out_ref[...] = out.astype(out_ref.dtype)


def pack_actor_params(params):
    """One-time (off hot path) head fusion + bias stacking + bf16 weight cast."""
    w1, b1, w2, b2, wm, bm, ws, bs = params
    w_head = jnp.concatenate([wm, ws], axis=1)          # (256, 2*A)
    b_head = jnp.concatenate([bm, bs], axis=1)          # (1, 2*A)   f32
    b_hidden = jnp.concatenate([b1, b2], axis=0)        # (2, 256)   f32
    return (w1.astype(jnp.bfloat16),
            w2.astype(jnp.bfloat16),
            w_head.astype(jnp.bfloat16),
            b_hidden.astype(jnp.float32),
            b_head.astype(jnp.float32))


def actor_forward(state, packed_params, *, tile_b=128):
    """Returns (mean, std), matching Actor.forward semantics."""
    w1, w2, w_head, b_hidden, b_head = packed_params
    B, state_dim = state.shape
    two_a = w_head.shape[1]
    a_dim = two_a // 2

    # Batch tile: multiple of 8 sublanes, capped at tile_b; pad B up to it.
    tb = min(tile_b, _round_up(B, 8))
    b_pad = _round_up(B, tb)

    x = state.astype(jnp.bfloat16)
    if b_pad != B:
        x = jnp.pad(x, ((0, b_pad - B), (0, 0)))

    grid = (b_pad // tb,)

    flops = 2 * b_pad * (state_dim * HIDDEN + HIDDEN * HIDDEN + HIDDEN * two_a)
    bytes_accessed = (x.size * x.dtype.itemsize
                      + sum(p.size * p.dtype.itemsize for p in packed_params)
                      + b_pad * two_a * 4)

    out = pl.pallas_call(
        actor_fwd_kernel,
        out_shape=jax.ShapeDtypeStruct((b_pad, two_a), jnp.float32),
        grid=grid,
        in_specs=[
            pl.BlockSpec((tb, state_dim), lambda i: (i, 0)),       # streamed
            pl.BlockSpec((state_dim, HIDDEN), lambda i: (0, 0)),   # resident
            pl.BlockSpec((HIDDEN, HIDDEN), lambda i: (0, 0)),      # resident
            pl.BlockSpec((HIDDEN, two_a), lambda i: (0, 0)),       # resident
            pl.BlockSpec((2, HIDDEN), lambda i: (0, 0)),           # resident
            pl.BlockSpec((1, two_a), lambda i: (0, 0)),            # resident
        ],
        out_specs=pl.BlockSpec((tb, two_a), lambda i: (i, 0)),
        compiler_params=pltpu.CompilerParams(
            dimension_semantics=("parallel",)),
        cost_estimate=pl.CostEstimate(
            flops=flops,
            transcendentals=b_pad * two_a,
            bytes_accessed=bytes_accessed),
    )(x, w1, w2, w_head, b_hidden, b_head)

    mean = out[:B, :a_dim]
    std = out[:B, a_dim:]
    return mean, std


def init_actor_params(key, state_dim, action_dim):
    """Deterministic synthetic init (PyTorch-like uniform fan-in scaling)."""
    ks = jax.random.split(key, 8)

    def lin(kw, kb, fan_in, fan_out):
        bound = 1.0 / jnp.sqrt(fan_in)
        w = jax.random.uniform(kw, (fan_in, fan_out), jnp.float32, -bound, bound)
        b = jax.random.uniform(kb, (1, fan_out), jnp.float32, -bound, bound)
        return w, b

    w1, b1 = lin(ks[0], ks[1], state_dim, HIDDEN)
    w2, b2 = lin(ks[2], ks[3], HIDDEN, HIDDEN)
    wm, bm = lin(ks[4], ks[5], HIDDEN, action_dim)
    ws, bs = lin(ks[6], ks[7], HIDDEN, action_dim)
    return (w1, b1, w2, b2, wm, bm, ws, bs)


if __name__ == "__main__":
    key = jax.random.PRNGKey(0)
    k_params, k_state = jax.random.split(key)

    batch = 4
    state_dim = 8
    action_dim = 4
    max_action = 2.0  # only used by Actor.sample(); forward() ignores it

    params = init_actor_params(k_params, state_dim, action_dim)
    packed = pack_actor_params(params)
    state = jax.random.normal(k_state, (batch, state_dim), jnp.float32)

    mean, std = actor_forward(state, packed)
    jax.block_until_ready((mean, std))

    # bf16-matched pure-JAX reference of the same math.
    w1, b1, w2, b2, wm, bm, ws, bs = params
    xb = state.astype(jnp.bfloat16)
    h = jnp.maximum(jnp.dot(xb, w1.astype(jnp.bfloat16),
                            preferred_element_type=jnp.float32) + b1, 0.0)
    h = jnp.maximum(jnp.dot(h.astype(jnp.bfloat16), w2.astype(jnp.bfloat16),
                            preferred_element_type=jnp.float32) + b2, 0.0)
    hb = h.astype(jnp.bfloat16)
    ref_mean = jnp.dot(hb, wm.astype(jnp.bfloat16),
                       preferred_element_type=jnp.float32) + bm
    ref_log_std = jnp.dot(hb, ws.astype(jnp.bfloat16),
                          preferred_element_type=jnp.float32) + bs
    ref_std = jnp.exp(jnp.clip(ref_log_std, -20.0, 2.0))

    assert mean.shape == (batch, action_dim) and std.shape == (batch, action_dim)
    assert jnp.allclose(mean, ref_mean, atol=2e-3, rtol=2e-3)
    assert jnp.allclose(std, ref_std, atol=2e-3, rtol=2e-3)
    assert bool(jnp.all(std > 0.0))

    # TODO(synk): Actor.sample() (rsample + tanh squash + log_prob) is a
    # stochastic host-level routine outside the forward() hot path; only
    # forward() is implemented as a kernel.

    print("KERNEL_OK")
</pallas_src>

<mosaic_0001>
module attributes {stable_mosaic.version = 11 : i64} {
  func.func @actor_fwd_kernel(%arg0: i32, %arg1: memref<8x8xbf16, #tpu.memory_space<vmem>>, %arg2: memref<8x256xbf16, #tpu.memory_space<vmem>>, %arg3: memref<256x256xbf16, #tpu.memory_space<vmem>>, %arg4: memref<256x8xbf16, #tpu.memory_space<vmem>>, %arg5: memref<2x256xf32, #tpu.memory_space<vmem>>, %arg6: memref<1x8xf32, #tpu.memory_space<vmem>>, %arg7: memref<8x8xf32, #tpu.memory_space<vmem>>) attributes {dimension_semantics = [#tpu.dimension_semantics<parallel>], iteration_bounds = array<i64: 1>, scalar_prefetch = 0 : i64, scratch_operands = 0 : i64, tpu.core_type = #tpu.core_type<tc>, window_params = [{transform_indices = @transform_0, window_bounds = array<i64: 8, 8>}, {pipeline_mode = #tpu.pipeline_mode<synchronous>, transform_indices = @transform_1, window_bounds = array<i64: 8, 256>}, {pipeline_mode = #tpu.pipeline_mode<synchronous>, transform_indices = @transform_2, window_bounds = array<i64: 256, 256>}, {pipeline_mode = #tpu.pipeline_mode<synchronous>, transform_indices = @transform_3, window_bounds = array<i64: 256, 8>}, {pipeline_mode = #tpu.pipeline_mode<synchronous>, transform_indices = @transform_4, window_bounds = array<i64: 2, 256>}, {pipeline_mode = #tpu.pipeline_mode<synchronous>, transform_indices = @transform_5, window_bounds = array<i64: 1, 8>}, {transform_indices = @transform_6, window_bounds = array<i64: 8, 8>}]} {
    %c0 = arith.constant 0 : index
    %c0_0 = arith.constant 0 : index
    %0 = vector.load %arg1[%c0, %c0_0] : memref<8x8xbf16, #tpu.memory_space<vmem>>, vector<8x8xbf16>
    %c0_1 = arith.constant 0 : index
    %c0_2 = arith.constant 0 : index
    %1 = vector.load %arg2[%c0_1, %c0_2] : memref<8x256xbf16, #tpu.memory_space<vmem>>, vector<8x256xbf16>
    %cst = arith.constant dense<0.000000e+00> : vector<8x256xf32>
    %2 = tpu.matmul %0, %1, %cst {dimension_numbers = #tpu.dot_dimension_numbers<[1], [0], [0], [1], [0, 0, 1, 1], [], []>} : vector<8x8xbf16>, vector<8x256xbf16>, vector<8x256xf32> -> vector<8x256xf32>
    %c0_3 = arith.constant 0 : index
    %c0_4 = arith.constant 0 : index
    %3 = vector.load %arg5[%c0_3, %c0_4] : memref<2x256xf32, #tpu.memory_space<vmem>>, vector<1x256xf32>
    %4 = vector.broadcast %3 : vector<1x256xf32> to vector<8x256xf32>
    %5 = arith.addf %2, %4 : vector<8x256xf32>
    %cst_5 = arith.constant 0.000000e+00 : f32
    %6 = vector.broadcast %cst_5 : f32 to vector<8x256xf32>
    %7 = arith.maximumf %5, %6 : vector<8x256xf32>
    %8 = arith.truncf %7 : vector<8x256xf32> to vector<8x256xbf16>
    %c0_6 = arith.constant 0 : index
    %c0_7 = arith.constant 0 : index
    %9 = vector.load %arg3[%c0_6, %c0_7] : memref<256x256xbf16, #tpu.memory_space<vmem>>, vector<256x256xbf16>
    %cst_8 = arith.constant dense<0.000000e+00> : vector<8x256xf32>
    %10 = tpu.matmul %8, %9, %cst_8 {dimension_numbers = #tpu.dot_dimension_numbers<[1], [0], [0], [1], [0, 0, 1, 1], [], []>} : vector<8x256xbf16>, vector<256x256xbf16>, vector<8x256xf32> -> vector<8x256xf32>
    %c1 = arith.constant 1 : index
    %c0_9 = arith.constant 0 : index
    %11 = vector.load %arg5[%c1, %c0_9] : memref<2x256xf32, #tpu.memory_space<vmem>>, vector<1x256xf32>
    %12 = vector.broadcast %11 : vector<1x256xf32> to vector<8x256xf32>
    %13 = arith.addf %10, %12 : vector<8x256xf32>
    %cst_10 = arith.constant 0.000000e+00 : f32
    %14 = vector.broadcast %cst_10 : f32 to vector<8x256xf32>
    %15 = arith.maximumf %13, %14 : vector<8x256xf32>
    %16 = arith.truncf %15 : vector<8x256xf32> to vector<8x256xbf16>
    %c0_11 = arith.constant 0 : index
    %c0_12 = arith.constant 0 : index
    %17 = vector.load %arg4[%c0_11, %c0_12] : memref<256x8xbf16, #tpu.memory_space<vmem>>, vector<256x8xbf16>
    %cst_13 = arith.constant dense<0.000000e+00> : vector<8x8xf32>
    %18 = tpu.matmul %16, %17, %cst_13 {dimension_numbers = #tpu.dot_dimension_numbers<[1], [0], [0], [1], [0, 0, 1, 1], [], []>} : vector<8x256xbf16>, vector<256x8xbf16>, vector<8x8xf32> -> vector<8x8xf32>
    %c0_14 = arith.constant 0 : index
    %c0_15 = arith.constant 0 : index
    %19 = vector.load %arg6[%c0_14, %c0_15] : memref<1x8xf32, #tpu.memory_space<vmem>>, vector<1x8xf32>
    %20 = vector.broadcast %19 : vector<1x8xf32> to vector<8x8xf32>
    %21 = arith.addf %18, %20 : vector<8x8xf32>
    %22 = tpu.iota {dimensions = array<i32: 1>} : vector<8x8xi32>
    %cst_16 = arith.constant -2.000000e+01 : f32
    %cst_17 = arith.constant 2.000000e+00 : f32
    %23 = vector.broadcast %cst_16 : f32 to vector<8x8xf32>
    %24 = arith.maximumf %23, %21 : vector<8x8xf32>
    %25 = vector.broadcast %cst_17 : f32 to vector<8x8xf32>
    %26 = arith.minimumf %25, %24 : vector<8x8xf32>
    %27 = math.exp %26 : vector<8x8xf32>
    %c4_i32 = arith.constant 4 : i32
    %28 = vector.broadcast %c4_i32 : i32 to vector<8x8xi32>
    %29 = arith.cmpi sge, %22, %28 : vector<8x8xi32>
    %30 = arith.select %29, %27, %21 : vector<8x8xi1>, vector<8x8xf32>
    %c0_18 = arith.constant 0 : index
    %c0_19 = arith.constant 0 : index
    %31 = vector.load %arg7[%c0_18, %c0_19] : memref<8x8xf32, #tpu.memory_space<vmem>>, vector<8x8xf32>
    tpu.vector_store %arg7[%c0_18, %c0_19], %30 {strides = array<i32>} : memref<8x8xf32, #tpu.memory_space<vmem>>, vector<8x8xf32>,
    return
  }
  func.func @transform_0(%arg0: i32) -> (i32, i32) {
    %c0_i32 = arith.constant 0 : i32
    %c0_i32_0 = arith.constant 0 : i32
    return %arg0, %c0_i32 : i32, i32
  }
  func.func @transform_1(%arg0: i32) -> (i32, i32) {
    %c0_i32 = arith.constant 0 : i32
    %c0_i32_0 = arith.constant 0 : i32
    %c0_i32_1 = arith.constant 0 : i32
    return %c0_i32, %c0_i32_0 : i32, i32
  }
  func.func @transform_2(%arg0: i32) -> (i32, i32) {
    %c0_i32 = arith.constant 0 : i32
    %c0_i32_0 = arith.constant 0 : i32
    %c0_i32_1 = arith.constant 0 : i32
    return %c0_i32, %c0_i32_0 : i32, i32
  }
  func.func @transform_3(%arg0: i32) -> (i32, i32) {
    %c0_i32 = arith.constant 0 : i32
    %c0_i32_0 = arith.constant 0 : i32
    %c0_i32_1 = arith.constant 0 : i32
    return %c0_i32, %c0_i32_0 : i32, i32
  }
  func.func @transform_4(%arg0: i32) -> (i32, i32) {
    %c0_i32 = arith.constant 0 : i32
    %c0_i32_0 = arith.constant 0 : i32
    %c0_i32_1 = arith.constant 0 : i32
    return %c0_i32, %c0_i32_0 : i32, i32
  }
  func.func @transform_5(%arg0: i32) -> (i32, i32) {
    %c0_i32 = arith.constant 0 : i32
    %c0_i32_0 = arith.constant 0 : i32
    %c0_i32_1 = arith.constant 0 : i32
    return %c0_i32, %c0_i32_0 : i32, i32
  }
  func.func @transform_6(%arg0: i32) -> (i32, i32) {
    %c0_i32 = arith.constant 0 : i32
    %c0_i32_0 = arith.constant 0 : i32
    return %arg0, %c0_i32 : i32, i32
  }
}

</mosaic_0001>

<llo_original>
// kernel: tpu_custom_call.1
$region0: #{tpu_custom_call.1}
  #allocation0 [shape = 'u32[]', space=smem, size = 0x4, offset = 0x4, fixed_abs, tag = 'smem constant byte address 0x4 - core index']
  #allocation1 [shape = 'u32[144,128]{1,0:T(1,128)}', space=vmem, size = 0x12000, scoped, tag = 'internal scratch']
  %s0 = inlined_call_operand.vmem [shape: bf16[8,8], index: 0, kind: input, shape index: {}]
  %s1 = inlined_call_operand.vmem [shape: bf16[8,256], index: 1, kind: input, shape index: {}]
  %s2 = inlined_call_operand.hbm [shape: bf16[256,256], index: 2, kind: input, shape index: {}]
  %s3 = inlined_call_operand.vmem [shape: bf16[256,8], index: 3, kind: input, shape index: {}]
  %s4 = inlined_call_operand.vmem [shape: f32[2,256], index: 4, kind: input, shape index: {}]
  %s5 = inlined_call_operand.vmem [shape: f32[1,8], index: 5, kind: input, shape index: {}]
  %s6 = inlined_call_operand.hbm [shape: f32[8,8], index: 6, kind: output, shape index: {}]
  %s7 = sld [smem:[#allocation0]]
  $region38: #{tpu_custom_call.1} parent=0
    _
  %s9 = ssub.s32 1, %s7
  %s10 = scalar_select 0, %s9, %s7
  $region1: #{tpu_custom_call.1} parent=0
    #allocation2 [shape = 'u8[131072]{0}', space=vmem, size = 0x20000, scoped, tag = 'input window, operand 2, single buffered']
    #allocation3 [shape = 's32[1]{0}', space=sflag, size = 0x4, scoped, tag = 'scoped memory for tpu_custom_call.1']
    #allocation4 [shape = 's32[1]{0}', space=sflag, size = 0x4, scoped, tag = 'scoped memory for tpu_custom_call.1']
    #allocation5 [shape = 'u8[4096]{0}', space=vmem, size = 0x1000, scoped, tag = 'output window, operand 0, single buffered']
    %11 = vsyncpa [#allocation3], 0
    %12 = vsyncpa [#allocation4], 0
    // Predicated region
    $region2: #{tpu_custom_call.1} parent=1 // pred_check
      _
    $region3: #{tpu_custom_call.1} parent=1 // pred_check_branch
      %14 = sbr.rel (0) target = $region5
    $region4: #{tpu_custom_call.1} parent=1 // pred_region
      _
    $region5: #{tpu_custom_call.1} parent=1 // pred_fallthru
      _
    // Predicated region
    $region6: #{tpu_custom_call.1} parent=1 // pred_check
      _
    $region7: #{tpu_custom_call.1} parent=1 // pred_check_branch
      %16 = sbr.rel (0) target = $region9
    $region8: #{tpu_custom_call.1} parent=1 // pred_region
      _
    $region9: #{tpu_custom_call.1} parent=1 // pred_fallthru
      _
    // Predicated region
    $region10: #{tpu_custom_call.1} parent=1 // pred_check
      _
    $region11: #{tpu_custom_call.1} parent=1 // pred_check_branch
      %18 = sbr.rel (0) target = $region13
    $region12: #{tpu_custom_call.1} parent=1 // pred_region
      %s20 = ssub.s32 4096, 4096
      %21 = vsyncadd [#allocation3], %s20
      %s22 = sshll.u32 [#allocation2], 4
      %s23 = int_to_ptr.vmem [resolvable:$true] %s22
      %28 = dma.hbm_to_vmem [thread:$0]  %s2, 4096, %s23, [#allocation3], 128, 128, 8
    $region13: #{tpu_custom_call.1} parent=1 // pred_fallthru
      _
    // Predicated region
    $region14: #{tpu_custom_call.1} parent=1 // pred_check
      _
    $region15: #{tpu_custom_call.1} parent=1 // pred_check_branch
      %30 = sbr.rel (0) target = $region17
    $region16: #{tpu_custom_call.1} parent=1 // pred_region
      _
    $region17: #{tpu_custom_call.1} parent=1 // pred_fallthru
      _
    // Predicated region
    $region18: #{tpu_custom_call.1} parent=1 // pred_check
      _
    $region19: #{tpu_custom_call.1} parent=1 // pred_check_branch
      %32 = sbr.rel (0) target = $region21
    $region20: #{tpu_custom_call.1} parent=1 // pred_region
      _
    $region21: #{tpu_custom_call.1} parent=1 // pred_fallthru
      _
    // Predicated region
    $region22: #{tpu_custom_call.1} parent=1 // pred_check
      _
    $region23: #{tpu_custom_call.1} parent=1 // pred_check_branch
      %34 = sbr.rel (0) target = $region25
    $region24: #{tpu_custom_call.1} parent=1 // pred_region
      _
    $region25: #{tpu_custom_call.1} parent=1 // pred_fallthru
      _
    // Predicated region
    $region26: #{tpu_custom_call.1} parent=1 // pred_check
      _
    $region27: #{tpu_custom_call.1} parent=1 // pred_check_branch
      %36 = sbr.rel (0) target = $region29
    $region28: #{tpu_custom_call.1} parent=1 // pred_region
      %37 = dma.done [#allocation3], 4096
    $region29: #{tpu_custom_call.1} parent=1 // pred_fallthru
      _
    %v39 = vld [vmem:[%s0] sm:$0xf]
    %v40 = vld [vmem:[%s1] sm:$0xff]
    %v41 = vld [vmem:[%s4] ss:$2 sm:$0x3]
    %v43 = vlaneseq
    %v44 = vshrl.u32 %v43, 7
    %v45 = vsub.s32 0, %v44
    %v46 = vrot.slane %v41, %v45
    %v47 = vlaneseq
    %v48 = vshrl.u32 %v47, 7
    %v49 = vsub.s32 1, %v48
    %v50 = vrot.slane %v41, %v49
    %v54 = vunpack.c.l.b16 %v40
    %v55 = vunpack.c.h.b16 %v40
    %v56 = vpack.c.b16 %v54, %v54
    %v57 = vpack.c.b16 %v55, %v55
    %vm58 = vcmask 64512
    %v60 = vsel %vm58, %v39, 0
    %vm62 = vcmask 1043456
    %v64 = vsel %vm62, %v56, 0
    %v67 = vsel %vm62, %v57, 0
    %69 = vmatprep.subr.bf16.mxu0 0
    %70 = vmatpush1.bf16.msra.mxu0 0
    %71 = vmatprep.subr.bf16.mxu0 0
    %72 = vmatpush1.bf16.msra.mxu0 0
    %73 = vmatprep.subr.bf16.mxu0 0
    %74 = vmatpush1.bf16.msra.mxu0 0
    %75 = vmatprep.subr.bf16.mxu0 0
    %76 = vmatpush1.bf16.msra.mxu0 0
    %77 = vmatprep.subr.bf16.mxu0 0
    %78 = vmatpush1.bf16.msra.mxu0 0
    %79 = vmatprep.subr.bf16.mxu0 0
    %80 = vmatpush1.bf16.msra.mxu0 0
    %81 = vmatprep.subr.bf16.mxu0 0
    %82 = vmatpush1.bf16.msra.mxu0 0
    %83 = vmatprep.subr.bf16.mxu0 %v67
    %84 = vmatpush1.bf16.msra.mxu0 %v64
    %85 = vmatprep.subr.bf16.mxu0 0
    %86 = vmatpush2.bf16.msra.mxu0 0
    %87 = vmatprep.subr.bf16.mxu0 0
    %88 = vmatpush2.bf16.msra.mxu0 0
    %89 = vmatprep.subr.bf16.mxu0 0
    %90 = vmatpush2.bf16.msra.mxu0 0
    %91 = vmatprep.subr.bf16.mxu0 0
    %92 = vmatpush2.bf16.msra.mxu0 0
    %93 = vmatprep.subr.bf16.mxu0 0
    %94 = vmatpush2.bf16.msra.mxu0 0
    %95 = vmatprep.subr.bf16.mxu0 0
    %96 = vmatpush2.bf16.msra.mxu0 0
    %97 = vmatprep.subr.bf16.mxu0 0
    %98 = vmatpush2.bf16.msra.mxu0 0
    %99 = vmatprep.subr.bf16.mxu0 0
    %100 = vmatpush2.bf16.msra.mxu0 0
    %101 = vmatprep.mubr.bf16.mxu0 0
    %102 = vmatmul.mubr.bf16.gmra.mxu0 %v60
    %v103 = vpop.f32.mrf.mxu0
    %v104 = vadd.f32 %v46, %v103
    %v105 = vpop.f32.mrf.mxu0
    %v106 = vadd.f32 %v50, %v105
    %v107 = vpop.f32.mrf.mxu0
    %v108 = vpop.f32.mrf.mxu0
    %109 = vdwg.mxu0
    %v110 = vmax.f32 %v104, 0.0
    %v111 = vmax.f32 %v106, 0.0
    %v112 = vpack.c.bf16 %v110, %v110
    %v113 = vpack.c.bf16 %v111, %v111
    %v114 = vld [vmem:[#allocation2] sm:$0xff]
    %v115 = vld [vmem:[#allocation2 + $0x8] sm:$0xff]
    %v116 = vld [vmem:[#allocation2 + $0x10] sm:$0xff]
    %v117 = vld [vmem:[#allocation2 + $0x18] sm:$0xff]
    %v118 = vld [vmem:[#allocation2 + $0x20] sm:$0xff]
    %v119 = vld [vmem:[#allocation2 + $0x28] sm:$0xff]
    %v120 = vld [vmem:[#allocation2 + $0x30] sm:$0xff]
    %v121 = vld [vmem:[#allocation2 + $0x38] sm:$0xff]
    %v122 = vld [vmem:[#allocation2 + $0x40] sm:$0xff]
    %v123 = vld [vmem:[#allocation2 + $0x48] sm:$0xff]
    %v124 = vld [vmem:[#allocation2 + $0x50] sm:$0xff]
    %v125 = vld [vmem:[#allocation2 + $0x58] sm:$0xff]
    %v126 = vld [vmem:[#allocation2 + $0x60] sm:$0xff]
    %v127 = vld [vmem:[#allocation2 + $0x68] sm:$0xff]
    %v128 = vld [vmem:[#allocation2 + $0x70] sm:$0xff]
    %v129 = vld [vmem:[#allocation2 + $0x78] sm:$0xff]
    %v130 = vld [vmem:[#allocation2 + $0x80] sm:$0xff]
    %v131 = vld [vmem:[#allocation2 + $0x88] sm:$0xff]
    %v132 = vld [vmem:[#allocation2 + $0x90] sm:$0xff]
    %v133 = vld [vmem:[#allocation2 + $0x98] sm:$0xff]
    %v134 = vld [vmem:[#allocation2 + $0xa0] sm:$0xff]
    %v135 = vld [vmem:[#allocation2 + $0xa8] sm:$0xff]
    %v136 = vld [vmem:[#allocation2 + $0xb0] sm:$0xff]
    %v137 = vld [vmem:[#allocation2 + $0xb8] sm:$0xff]
    %v138 = vld [vmem:[#allocation2 + $0xc0] sm:$0xff]
    %v139 = vld [vmem:[#allocation2 + $0xc8] sm:$0xff]
    %v140 = vld [vmem:[#allocation2 + $0xd0] sm:$0xff]
    %v141 = vld [vmem:[#allocation2 + $0xd8] sm:$0xff]
    %v142 = vld [vmem:[#allocation2 + $0xe0] sm:$0xff]
    %v143 = vld [vmem:[#allocation2 + $0xe8] sm:$0xff]
    %v144 = vld [vmem:[#allocation2 + $0xf0] sm:$0xff]
    %v145 = vld [vmem:[#allocation2 + $0xf8] sm:$0xff]
    %s146 = scalar_lea.vmem %s4, 1
    %v147 = vld [vmem:[%s146] ss:$2 sm:$0x3]
    %v149 = vlaneseq
    %v150 = vshrl.u32 %v149, 7
    %v151 = vsub.s32 0, %v150
    %v152 = vrot.slane %v147, %v151
    %v153 = vlaneseq
    %v154 = vshrl.u32 %v153, 7
    %v155 = vsub.s32 1, %v154
    %v156 = vrot.slane %v147, %v155
    %v191 = vunpack.c.l.b16 %v114
    %v192 = vunpack.c.h.b16 %v114
    %v193 = vunpack.c.l.b16 %v115
    %v194 = vunpack.c.h.b16 %v115
    %v195 = vunpack.c.l.b16 %v116
    %v196 = vunpack.c.h.b16 %v116
    %v197 = vunpack.c.l.b16 %v117
    %v198 = vunpack.c.h.b16 %v117
    %v199 = vunpack.c.l.b16 %v118
    %v200 = vunpack.c.h.b16 %v118
    %v201 = vunpack.c.l.b16 %v119
    %v202 = vunpack.c.h.b16 %v119
    %v203 = vunpack.c.l.b16 %v120
    %v204 = vunpack.c.h.b16 %v120
    %v205 = vunpack.c.l.b16 %v121
    %v206 = vunpack.c.h.b16 %v121
    %v207 = vunpack.c.l.b16 %v122
    %v208 = vunpack.c.h.b16 %v122
    %v209 = vunpack.c.l.b16 %v123
    %v210 = vunpack.c.h.b16 %v123
    %v211 = vunpack.c.l.b16 %v124
    %v212 = vunpack.c.h.b16 %v124
    %v213 = vunpack.c.l.b16 %v125
    %v214 = vunpack.c.h.b16 %v125
    %v215 = vunpack.c.l.b16 %v126
    %v216 = vunpack.c.h.b16 %v126
    %v217 = vunpack.c.l.b16 %v127
    %v218 = vunpack.c.h.b16 %v127
    %v219 = vunpack.c.l.b16 %v128
    %v220 = vunpack.c.h.b16 %v128
    %v221 = vunpack.c.l.b16 %v129
    %v222 = vunpack.c.h.b16 %v129
    %v223 = vunpack.c.l.b16 %v130
    %v224 = vunpack.c.h.b16 %v130
    %v225 = vunpack.c.l.b16 %v131
    %v226 = vunpack.c.h.b16 %v131
    %v227 = vunpack.c.l.b16 %v132
    %v228 = vunpack.c.h.b16 %v132
    %v229 = vunpack.c.l.b16 %v133
    %v230 = vunpack.c.h.b16 %v133
    %v231 = vunpack.c.l.b16 %v134
    %v232 = vunpack.c.h.b16 %v134
    %v233 = vunpack.c.l.b16 %v135
    %v234 = vunpack.c.h.b16 %v135
    %v235 = vunpack.c.l.b16 %v136
    %v236 = vunpack.c.h.b16 %v136
    %v237 = vunpack.c.l.b16 %v137
    %v238 = vunpack.c.h.b16 %v137
    %v239 = vunpack.c.l.b16 %v138
    %v240 = vunpack.c.h.b16 %v138
    %v241 = vunpack.c.l.b16 %v139
    %v242 = vunpack.c.h.b16 %v139
    %v243 = vunpack.c.l.b16 %v140
    %v244 = vunpack.c.h.b16 %v140
    %v245 = vunpack.c.l.b16 %v141
    %v246 = vunpack.c.h.b16 %v141
    %v247 = vunpack.c.l.b16 %v142
    %v248 = vunpack.c.h.b16 %v142
    %v249 = vunpack.c.l.b16 %v143
    %v250 = vunpack.c.h.b16 %v143
    %v251 = vunpack.c.l.b16 %v144
    %v252 = vunpack.c.h.b16 %v144
    %v253 = vunpack.c.l.b16 %v145
    %v254 = vunpack.c.h.b16 %v145
    %v255 = vpack.c.b16 %v193, %v191
    %v256 = vpack.c.b16 %v194, %v192
    %v257 = vpack.c.b16 %v197, %v195
    %v258 = vpack.c.b16 %v198, %v196
    %v259 = vpack.c.b16 %v201, %v199
    %v260 = vpack.c.b16 %v202, %v200
    %v261 = vpack.c.b16 %v205, %v203
    %v262 = vpack.c.b16 %v206, %v204
    %v263 = vpack.c.b16 %v209, %v207
    %v264 = vpack.c.b16 %v210, %v208
    %v265 = vpack.c.b16 %v213, %v211
    %v266 = vpack.c.b16 %v214, %v212
    %v267 = vpack.c.b16 %v217, %v215
    %v268 = vpack.c.b16 %v218, %v216
    %v269 = vpack.c.b16 %v221, %v219
    %v270 = vpack.c.b16 %v222, %v220
    %v271 = vpack.c.b16 %v225, %v223
    %v272 = vpack.c.b16 %v226, %v224
    %v273 = vpack.c.b16 %v229, %v227
    %v274 = vpack.c.b16 %v230, %v228
    %v275 = vpack.c.b16 %v233, %v231
    %v276 = vpack.c.b16 %v234, %v232
    %v277 = vpack.c.b16 %v237, %v235
    %v278 = vpack.c.b16 %v238, %v236
    %v279 = vpack.c.b16 %v241, %v239
    %v280 = vpack.c.b16 %v242, %v240
    %v281 = vpack.c.b16 %v245, %v243
    %v282 = vpack.c.b16 %v246, %v244
    %v283 = vpack.c.b16 %v249, %v247
    %v284 = vpack.c.b16 %v250, %v248
    %v285 = vpack.c.b16 %v253, %v251
    %v286 = vpack.c.b16 %v254, %v252
    %319 = vmatprep.subr.bf16.mxu0 %v270
    %320 = vmatpush1.bf16.msra.mxu0 %v269
    %321 = vmatprep.subr.bf16.mxu0 %v268
    %322 = vmatpush1.bf16.msra.mxu0 %v267
    %323 = vmatprep.subr.bf16.mxu0 %v266
    %324 = vmatpush1.bf16.msra.mxu0 %v265
    %325 = vmatprep.subr.bf16.mxu0 %v264
    %326 = vmatpush1.bf16.msra.mxu0 %v263
    %327 = vmatprep.subr.bf16.mxu0 %v262
    %328 = vmatpush1.bf16.msra.mxu0 %v261
    %329 = vmatprep.subr.bf16.mxu0 %v260
    %330 = vmatpush1.bf16.msra.mxu0 %v259
    %331 = vmatprep.subr.bf16.mxu0 %v258
    %332 = vmatpush1.bf16.msra.mxu0 %v257
    %333 = vmatprep.subr.bf16.mxu0 %v256
    %334 = vmatpush1.bf16.msra.mxu0 %v255
    %335 = vmatprep.subr.bf16.mxu0 %v286
    %336 = vmatpush2.bf16.msra.mxu0 %v285
    %337 = vmatprep.subr.bf16.mxu0 %v284
    %338 = vmatpush2.bf16.msra.mxu0 %v283
    %339 = vmatprep.subr.bf16.mxu0 %v282
    %340 = vmatpush2.bf16.msra.mxu0 %v281
    %341 = vmatprep.subr.bf16.mxu0 %v280
    %342 = vmatpush2.bf16.msra.mxu0 %v279
    %343 = vmatprep.subr.bf16.mxu0 %v278
    %344 = vmatpush2.bf16.msra.mxu0 %v277
    %345 = vmatprep.subr.bf16.mxu0 %v276
    %346 = vmatpush2.bf16.msra.mxu0 %v275
    %347 = vmatprep.subr.bf16.mxu0 %v274
    %348 = vmatpush2.bf16.msra.mxu0 %v273
    %349 = vmatprep.subr.bf16.mxu0 %v272
    %350 = vmatpush2.bf16.msra.mxu0 %v271
    %351 = vmatprep.mubr.bf16.mxu0 %v113
    %352 = vmatmul.mubr.bf16.gmra.mxu0 %v112
    %v353 = vpop.f32.mrf.mxu0
    %v354 = vadd.f32 %v152, %v353
    %v355 = vpop.f32.mrf.mxu0
    %v356 = vadd.f32 %v156, %v355
    %v357 = vpop.f32.mrf.mxu0
    %v358 = vpop.f32.mrf.mxu0
    %359 = vdwg.mxu0
    %v360 = vmax.f32 %v354, 0.0
    %v361 = vmax.f32 %v356, 0.0
    %v362 = vpack.c.bf16 %v360, %v360
    %v363 = vpack.c.bf16 %v361, %v361
    %v364 = vld [vmem:[%s3] sm:$0xf]
    %v365 = vld [vmem:[%s3 + $0x4] sm:$0xf]
    %v366 = vld [vmem:[%s3 + $0x8] sm:$0xf]
    %v367 = vld [vmem:[%s3 + $0xc] sm:$0xf]
    %v368 = vld [vmem:[%s3 + $0x10] sm:$0xf]
    %v369 = vld [vmem:[%s3 + $0x14] sm:$0xf]
    %v370 = vld [vmem:[%s3 + $0x18] sm:$0xf]
    %v371 = vld [vmem:[%s3 + $0x1c] sm:$0xf]
    %v372 = vld [vmem:[%s3 + $0x20] sm:$0xf]
    %v373 = vld [vmem:[%s3 + $0x24] sm:$0xf]
    %v374 = vld [vmem:[%s3 + $0x28] sm:$0xf]
    %v375 = vld [vmem:[%s3 + $0x2c] sm:$0xf]
    %v376 = vld [vmem:[%s3 + $0x30] sm:$0xf]
    %v377 = vld [vmem:[%s3 + $0x34] sm:$0xf]
    %v378 = vld [vmem:[%s3 + $0x38] sm:$0xf]
    %v379 = vld [vmem:[%s3 + $0x3c] sm:$0xf]
    %v380 = vld [vmem:[%s3 + $0x40] sm:$0xf]
    %v381 = vld [vmem:[%s3 + $0x44] sm:$0xf]
    %v382 = vld [vmem:[%s3 + $0x48] sm:$0xf]
    %v383 = vld [vmem:[%s3 + $0x4c] sm:$0xf]
    %v384 = vld [vmem:[%s3 + $0x50] sm:$0xf]
    %v385 = vld [vmem:[%s3 + $0x54] sm:$0xf]
    %v386 = vld [vmem:[%s3 + $0x58] sm:$0xf]
    %v387 = vld [vmem:[%s3 + $0x5c] sm:$0xf]
    %v388 = vld [vmem:[%s3 + $0x60] sm:$0xf]
    %v389 = vld [vmem:[%s3 + $0x64] sm:$0xf]
    %v390 = vld [vmem:[%s3 + $0x68] sm:$0xf]
    %v391 = vld [vmem:[%s3 + $0x6c] sm:$0xf]
    %v392 = vld [vmem:[%s3 + $0x70] sm:$0xf]
    %v393 = vld [vmem:[%s3 + $0x74] sm:$0xf]
    %v394 = vld [vmem:[%s3 + $0x78] sm:$0xf]
    %v395 = vld [vmem:[%s3 + $0x7c] sm:$0xf]
    %v396 = vld [vmem:[%s5] sm:$0x1]
    %v398 = vlaneseq
    %v399 = vshrl.u32 %v398, 7
    %v400 = vsub.s32 0, %v399
    %v401 = vrot.slane %v396, %v400
    %v435 = vunpack.c.l.b16 %v364
    %v436 = vunpack.c.l.b16 %v365
    %v437 = vunpack.c.l.b16 %v366
    %v438 = vunpack.c.l.b16 %v367
    %v439 = vunpack.c.l.b16 %v368
    %v440 = vunpack.c.l.b16 %v369
    %v441 = vunpack.c.l.b16 %v370
    %v442 = vunpack.c.l.b16 %v371
    %v443 = vunpack.c.l.b16 %v372
    %v444 = vunpack.c.l.b16 %v373
    %v445 = vunpack.c.l.b16 %v374
    %v446 = vunpack.c.l.b16 %v375
    %v447 = vunpack.c.l.b16 %v376
    %v448 = vunpack.c.l.b16 %v377
    %v449 = vunpack.c.l.b16 %v378
    %v450 = vunpack.c.l.b16 %v379
    %v451 = vunpack.c.l.b16 %v380
    %v452 = vunpack.c.l.b16 %v381
    %v453 = vunpack.c.l.b16 %v382
    %v454 = vunpack.c.l.b16 %v383
    %v455 = vunpack.c.l.b16 %v384
    %v456 = vunpack.c.l.b16 %v385
    %v457 = vunpack.c.l.b16 %v386
    %v458 = vunpack.c.l.b16 %v387
    %v459 = vunpack.c.l.b16 %v388
    %v460 = vunpack.c.l.b16 %v389
    %v461 = vunpack.c.l.b16 %v390
    %v462 = vunpack.c.l.b16 %v391
    %v463 = vunpack.c.l.b16 %v392
    %v464 = vunpack.c.l.b16 %v393
    %v465 = vunpack.c.l.b16 %v394
    %v466 = vunpack.c.l.b16 %v395
    %v467 = vpack.c.b16 %v436, %v435
    %v468 = vpack.c.b16 %v438, %v437
    %v469 = vpack.c.b16 %v440, %v439
    %v470 = vpack.c.b16 %v442, %v441
    %v471 = vpack.c.b16 %v444, %v443
    %v472 = vpack.c.b16 %v446, %v445
    %v473 = vpack.c.b16 %v448, %v447
    %v474 = vpack.c.b16 %v450, %v449
    %v475 = vpack.c.b16 %v452, %v451
    %v476 = vpack.c.b16 %v454, %v453
    %v477 = vpack.c.b16 %v456, %v455
    %v478 = vpack.c.b16 %v458, %v457
    %v479 = vpack.c.b16 %v460, %v459
    %v480 = vpack.c.b16 %v462, %v461
    %v481 = vpack.c.b16 %v464, %v463
    %v482 = vpack.c.b16 %v466, %v465
    %499 = vmatprep.subr.bf16.mxu0 0
    %500 = vmatpush1.bf16.msra.mxu0 %v474
    %501 = vmatprep.subr.bf16.mxu0 0
    %502 = vmatpush1.bf16.msra.mxu0 %v473
    %503 = vmatprep.subr.bf16.mxu0 0
    %504 = vmatpush1.bf16.msra.mxu0 %v472
    %505 = vmatprep.subr.bf16.mxu0 0
    %506 = vmatpush1.bf16.msra.mxu0 %v471
    %507 = vmatprep.subr.bf16.mxu0 0
    %508 = vmatpush1.bf16.msra.mxu0 %v470
    %509 = vmatprep.subr.bf16.mxu0 0
    %510 = vmatpush1.bf16.msra.mxu0 %v469
    %511 = vmatprep.subr.bf16.mxu0 0
    %512 = vmatpush1.bf16.msra.mxu0 %v468
    %513 = vmatprep.subr.bf16.mxu0 0
    %514 = vmatpush1.bf16.msra.mxu0 %v467
    %515 = vmatprep.subr.bf16.mxu0 0
    %516 = vmatpush2.bf16.msra.mxu0 %v482
    %517 = vmatprep.subr.bf16.mxu0 0
    %518 = vmatpush2.bf16.msra.mxu0 %v481
    %519 = vmatprep.subr.bf16.mxu0 0
    %520 = vmatpush2.bf16.msra.mxu0 %v480
    %521 = vmatprep.subr.bf16.mxu0 0
    %522 = vmatpush2.bf16.msra.mxu0 %v479
    %523 = vmatprep.subr.bf16.mxu0 0
    %524 = vmatpush2.bf16.msra.mxu0 %v478
    %525 = vmatprep.subr.bf16.mxu0 0
    %526 = vmatpush2.bf16.msra.mxu0 %v477
    %527 = vmatprep.subr.bf16.mxu0 0
    %528 = vmatpush2.bf16.msra.mxu0 %v476
    %529 = vmatprep.subr.bf16.mxu0 0
    %530 = vmatpush2.bf16.msra.mxu0 %v475
    %531 = vmatprep.mubr.bf16.mxu0 %v363
    %532 = vmatmul.mubr.bf16.gmra.mxu0 %v362
    %v533 = vpop.f32.mrf.mxu0
    %v534 = vadd.f32 %v401, %v533
    %v535 = vpop.f32.mrf.mxu0
    %v536 = vpop.f32.mrf.mxu0
    %v537 = vpop.f32.mrf.mxu0
    %538 = vdwg.mxu0
    %v539 = vlaneseq
    %v540 = vand.u32 %v539, 127
    %v541 = vmax.f32 %v534, -20.0
    %v542 = vmin.f32 %v541, 2.0
    %v543 = vmul.f32 %v542, 1.442695
    %v544 = vpow.pop %v543
    %vm545 = vcmp.ge.s32.totalorder %v540, 4
    %v546 = vsel %vm545, %v544, %v534
    %547 = vst.msk [vmem:[#allocation5] sm:$0xff] %vm58, %v546
    // Predicated region
    $region30: #{tpu_custom_call.1} parent=1 // pred_check
      _
    $region31: #{tpu_custom_call.1} parent=1 // pred_check_branch
      %549 = sbr.rel (0) target = $region33
    $region32: #{tpu_custom_call.1} parent=1 // pred_region
      %s551 = ssub.s32 128, 128
      %552 = vsyncadd [#allocation4], %s551
      %s554 = sshll.u32 [#allocation5], 4
      %s555 = int_to_ptr.vmem [resolvable:$true] %s554
      %557 = dma.vmem_to_hbm [thread:$0]  %s555, 128, %s6, [#allocation4]
    $region33: #{tpu_custom_call.1} parent=1 // pred_fallthru
      _
    // Predicated region
    $region34: #{tpu_custom_call.1} parent=1 // pred_check
      _
    $region35: #{tpu_custom_call.1} parent=1 // pred_check_branch
      %559 = sbr.rel (0) target = $region37
    $region36: #{tpu_custom_call.1} parent=1 // pred_region
      %560 = dma.done [#allocation4], 128
    $region37: #{tpu_custom_call.1} parent=1 // pred_fallthru
      _
    %561 = vsyncpa [#allocation3], 1
    %562 = vsyncpa [#allocation4], 1

</llo_original>
